<compile_context>
chip_gen: v7x
topology: tpu7x:2x2x1
jax: 0.10.0
libtpu: 0.0.40
codegen_flags: <defaults>
</compile_context>

<pallas_src>
import jax
import jax.numpy as jnp
import numpy as np
from jax.experimental import pallas as pl
from jax.experimental.pallas import tpu as pltpu

DENOISE_WINDOW = 7          # self.denoise_window_size
DENOISE_THRESHOLD = 0.5     # self.denoise_threshold
_PAD = (DENOISE_WINDOW - 1) // 2        # 'same' zero padding = 3
_SUM_THRESHOLD = 4          # 0/1 input: sum/7 > 0.5  <=>  integer sum >= 4


def _denoise_kernel(x_ref, out_ref, xp_ref):
    """Window-7 'same' moving sum over time + threshold, one wav.

    x_ref  : (T, C) int8  — 0/1 multi-hot chroma, natural (time, chroma) layout.
    out_ref: (T, C) int8  — (moving-average > 0.5) multi-hot.
    xp_ref : (T + 6, C) int32 scratch — zero-padded, widened copy (halo rows).
    """
    t, _ = out_ref.shape
    # Zero the scratch (covers the 3 halo rows on each side), then copy the
    # int8 block in ONCE, widened to int32 for the VPU adds.
    xp_ref[...] = jnp.zeros_like(xp_ref)
    xp_ref[pl.ds(_PAD, t), :] = x_ref[...].astype(jnp.int32)
    # 7 shifted taps of the fully VMEM-resident padded scratch, tree-summed so
    # the VPU dependency chain is 3 deep instead of 6.
    s0 = xp_ref[pl.ds(0, t), :] + xp_ref[pl.ds(1, t), :]
    s1 = xp_ref[pl.ds(2, t), :] + xp_ref[pl.ds(3, t), :]
    s2 = xp_ref[pl.ds(4, t), :] + xp_ref[pl.ds(5, t), :]
    win_sum = (s0 + s1) + (s2 + xp_ref[pl.ds(6, t), :])
    # Exact equivalent of  conv1d(ones(7)/7, pad=3) > 0.5  for 0/1 inputs.
    out_ref[...] = (win_sum >= _SUM_THRESHOLD).astype(jnp.int8)


def denoise_chroma(chroma: jax.Array) -> jax.Array:
    """(B, T, C) 0/1 multi-hot chroma -> (B, T, C) bool denoised chroma.

    Matches torch:
      conv1d(chroma[..., c], ones(7)/7, padding=3) > 0.5   for each channel c.
    NOTE: the integer-sum threshold is exact because the upstream chroma is a
    strict 0/1 multi-hot (it is stacked from multi-hot chord vectors); feed
    int8/bool data to get the 4x-narrower HBM reads.
    """
    B, T, C = chroma.shape
    x = chroma.astype(jnp.int8)     # no-op when the caller already passes int8

    out_i8 = pl.pallas_call(
        _denoise_kernel,
        out_shape=jax.ShapeDtypeStruct((B, T, C), jnp.int8),
        grid=(B,),
        in_specs=[pl.BlockSpec((None, T, C), lambda b: (b, 0, 0))],
        out_specs=pl.BlockSpec((None, T, C), lambda b: (b, 0, 0)),
        scratch_shapes=[pltpu.VMEM((T + 2 * _PAD, C), jnp.int32)],
        compiler_params=pltpu.CompilerParams(
            dimension_semantics=("parallel",)),
        cost_estimate=pl.CostEstimate(
            flops=B * T * C * DENOISE_WINDOW,
            transcendentals=0,
            bytes_accessed=2 * B * T * C),      # int8 in + int8 out, no plumbing
    )(x)

    # torch `filtered_signals > threshold` yields bool; int8 -> bool is a cheap
    # 1-byte elementwise cast — no transpose / pad passes remain.
    return out_i8.astype(jnp.bool_)


def _denoise_ref(chroma_np: np.ndarray) -> np.ndarray:
    """Pure-numpy reference matching torch conv1d(window=7, pad=3) + threshold."""
    B, T, C = chroma_np.shape
    xp = np.pad(chroma_np.astype(np.float32), ((0, 0), (_PAD, _PAD), (0, 0)))
    out = np.zeros((B, T, C), dtype=bool)
    for t in range(T):
        win_mean = xp[:, t:t + DENOISE_WINDOW, :].sum(axis=1) / DENOISE_WINDOW
        out[:, t, :] = win_mean > DENOISE_THRESHOLD
    return out


if __name__ == "__main__":
    key = jax.random.PRNGKey(0)
    B, chroma_len, n_chroma = 2, 16, 12   # small shapes consistent with forward

    # Synthetic 0/1 multi-hot chroma, standing in for the chroma stacked
    # upstream from the BTC chord predictions (each row is a 12-dim multi-hot).
    chroma = (jax.random.uniform(key, (B, chroma_len, n_chroma)) > 0.6).astype(
        jnp.int8)

    out = jax.block_until_ready(denoise_chroma(chroma))

    ref = _denoise_ref(np.asarray(chroma))
    assert out.shape == (B, chroma_len, n_chroma) and out.dtype == jnp.bool_
    assert np.array_equal(np.asarray(out), ref), "Pallas output != reference"
    print("KERNEL_OK")
</pallas_src>

<mosaic_0001>
module attributes {stable_mosaic.version = 11 : i64} {
  func.func @_denoise_kernel(%arg0: i32, %arg1: memref<1x16x12xi8, #tpu.memory_space<vmem>>, %arg2: memref<1x16x12xi8, #tpu.memory_space<vmem>>, %arg3: memref<22x12xi32, #tpu.memory_space<vmem>>) attributes {dimension_semantics = [#tpu.dimension_semantics<parallel>], iteration_bounds = array<i64: 2>, scalar_prefetch = 0 : i64, scratch_operands = 1 : i64, tpu.core_type = #tpu.core_type<tc>, window_params = [{transform_indices = @transform_0, window_bounds = array<i64: 1, 16, 12>}, {transform_indices = @transform_1, window_bounds = array<i64: 1, 16, 12>}]} {
    %c0_i32 = arith.constant 0 : i32
    %0 = vector.broadcast %c0_i32 : i32 to vector<22x12xi32>
    %c0 = arith.constant 0 : index
    %c0_0 = arith.constant 0 : index
    %1 = vector.load %arg3[%c0, %c0_0] : memref<22x12xi32, #tpu.memory_space<vmem>>, vector<22x12xi32>
    tpu.vector_store %arg3[%c0, %c0_0], %0 {strides = array<i32>} : memref<22x12xi32, #tpu.memory_space<vmem>>, vector<22x12xi32>,
    %c0_1 = arith.constant 0 : index
    %c0_2 = arith.constant 0 : index
    %c0_3 = arith.constant 0 : index
    %2 = vector.load %arg1[%c0_1, %c0_2, %c0_3] : memref<1x16x12xi8, #tpu.memory_space<vmem>>, vector<1x16x12xi8>
    %3 = vector.shape_cast %2 : vector<1x16x12xi8> to vector<16x12xi8>
    %4 = arith.extsi %3 : vector<16x12xi8> to vector<16x12xi32>
    %c3 = arith.constant 3 : index
    %c0_4 = arith.constant 0 : index
    %5 = vector.load %arg3[%c3, %c0_4] : memref<22x12xi32, #tpu.memory_space<vmem>>, vector<16x12xi32>
    tpu.vector_store %arg3[%c3, %c0_4], %4 {strides = array<i32>} : memref<22x12xi32, #tpu.memory_space<vmem>>, vector<16x12xi32>,
    %c0_5 = arith.constant 0 : index
    %c0_6 = arith.constant 0 : index
    %6 = vector.load %arg3[%c0_5, %c0_6] : memref<22x12xi32, #tpu.memory_space<vmem>>, vector<16x12xi32>
    %c1 = arith.constant 1 : index
    %c0_7 = arith.constant 0 : index
    %7 = vector.load %arg3[%c1, %c0_7] : memref<22x12xi32, #tpu.memory_space<vmem>>, vector<16x12xi32>
    %8 = arith.addi %6, %7 : vector<16x12xi32>
    %c2 = arith.constant 2 : index
    %c0_8 = arith.constant 0 : index
    %9 = vector.load %arg3[%c2, %c0_8] : memref<22x12xi32, #tpu.memory_space<vmem>>, vector<16x12xi32>
    %c3_9 = arith.constant 3 : index
    %c0_10 = arith.constant 0 : index
    %10 = vector.load %arg3[%c3_9, %c0_10] : memref<22x12xi32, #tpu.memory_space<vmem>>, vector<16x12xi32>
    %11 = arith.addi %9, %10 : vector<16x12xi32>
    %c4 = arith.constant 4 : index
    %c0_11 = arith.constant 0 : index
    %12 = vector.load %arg3[%c4, %c0_11] : memref<22x12xi32, #tpu.memory_space<vmem>>, vector<16x12xi32>
    %c5 = arith.constant 5 : index
    %c0_12 = arith.constant 0 : index
    %13 = vector.load %arg3[%c5, %c0_12] : memref<22x12xi32, #tpu.memory_space<vmem>>, vector<16x12xi32>
    %14 = arith.addi %12, %13 : vector<16x12xi32>
    %15 = arith.addi %8, %11 : vector<16x12xi32>
    %c6 = arith.constant 6 : index
    %c0_13 = arith.constant 0 : index
    %16 = vector.load %arg3[%c6, %c0_13] : memref<22x12xi32, #tpu.memory_space<vmem>>, vector<16x12xi32>
    %17 = arith.addi %14, %16 : vector<16x12xi32>
    %18 = arith.addi %15, %17 : vector<16x12xi32>
    %c4_i32 = arith.constant 4 : i32
    %19 = vector.broadcast %c4_i32 : i32 to vector<16x12xi32>
    %20 = arith.cmpi sge, %18, %19 : vector<16x12xi32>
    %21 = arith.extui %20 : vector<16x12xi1> to vector<16x12xi8>
    %c0_14 = arith.constant 0 : index
    %c0_15 = arith.constant 0 : index
    %c0_16 = arith.constant 0 : index
    %22 = vector.load %arg2[%c0_14, %c0_15, %c0_16] : memref<1x16x12xi8, #tpu.memory_space<vmem>>, vector<1x16x12xi8>
    %23 = vector.shape_cast %22 : vector<1x16x12xi8> to vector<16x12xi8>
    %24 = vector.shape_cast %21 : vector<16x12xi8> to vector<1x16x12xi8>
    tpu.vector_store %arg2[%c0_14, %c0_15, %c0_16], %24 {strides = array<i32>} : memref<1x16x12xi8, #tpu.memory_space<vmem>>, vector<1x16x12xi8>,
    return
  }
  func.func @transform_0(%arg0: i32) -> (i32, i32, i32) {
    %c0_i32 = arith.constant 0 : i32
    %c0_i32_0 = arith.constant 0 : i32
    %c0_i32_1 = arith.constant 0 : i32
    return %arg0, %c0_i32, %c0_i32_0 : i32, i32, i32
  }
  func.func @transform_1(%arg0: i32) -> (i32, i32, i32) {
    %c0_i32 = arith.constant 0 : i32
    %c0_i32_0 = arith.constant 0 : i32
    %c0_i32_1 = arith.constant 0 : i32
    return %arg0, %c0_i32, %c0_i32_0 : i32, i32, i32
  }
}

</mosaic_0001>

<llo_original>
// kernel: tpu_custom_call.1
$region0: #{tpu_custom_call.1}
  #allocation0 [shape = 'u32[]', space=smem, size = 0x4, offset = 0x4, fixed_abs, tag = 'smem constant byte address 0x4 - core index']
  #allocation1 [shape = 'u32[144,128]{1,0:T(1,128)}', space=vmem, size = 0x12000, scoped, tag = 'internal scratch']
  #allocation2 [shape = 's32[22,12]{1,0:T(8,128)}', space=vmem, size = 0x3000, scoped, tag = 'scratch operand']
  %s0 = inlined_call_operand.hbm [shape: s8[2,16,12], index: 0, kind: input, shape index: {}]
  %s1 = inlined_call_operand.hbm [shape: s8[2,16,12], index: 1, kind: output, shape index: {}]
  %s2 = sld [smem:[#allocation0]]
  $region41: #{tpu_custom_call.1} parent=0
    _
  %s4 = ssub.s32 1, %s2
  %s5 = scalar_select 0, %s4, %s2
  $region1: #{tpu_custom_call.1} parent=0
    #allocation3 [shape = 'u8[4096]{0}', space=vmem, size = 0x1000, scoped, tag = 'input window, operand 0']
    #allocation4 [shape = 's32[2]{0}', space=sflag, size = 0x8, scoped, tag = 'scoped memory for tpu_custom_call.1']
    #allocation5 [shape = 's32[2]{0}', space=sflag, size = 0x8, scoped, tag = 'scoped memory for tpu_custom_call.1']
    #allocation6 [shape = 'u8[4096]{0}', space=vmem, size = 0x1000, scoped, tag = 'output window, operand 0']
    %6 = vsyncpa [#allocation4], 0
    %s7 = scalar_lea.sflag [#allocation4], 1
    %8 = vsyncpa %s7, 0
    %9 = vsyncpa [#allocation5], 0
    %s10 = scalar_lea.sflag [#allocation5], 1
    %11 = vsyncpa %s10, 0
    loop: start=0, step=1, limit=4
    $region2: #{tpu_custom_call.1} parent=1 // loop_pre_header
      _
    $region3: #{tpu_custom_call.1} parent=1 // loop_header
      %s13 = sphi 0, %s17
      %p14 = scmp.ge.s32.totalorder %s13, 4
      %s23 = sphi 0, %s25
      %s26 = sphi 0, %s23
      %s27 = sphi 0, %s26
      %s43 = sphi 0, %s27
      %s49 = sphi 0, %s51
      %s52 = sphi 0, %s49
      %s53 = sphi 0, %s52
      %s69 = sphi 0, %s53
    $region4: #{tpu_custom_call.1} parent=1 // loop_header_branch
      %16 = sbr.rel (%p14) target = $region8
    $region5: #{tpu_custom_call.1} parent=1 // loop_body
      %s18 = ssub.s32 %s13, 1
      %s19 = ssub.s32 %s13, 2
      %s20 = sadd.s32 %s13, 1
      %s21 = ssub.s32 %s13, %s20
      %p22 = scmp.eq.s32.totalorder %s21, 0
      %s24 = sadd.s32 %s23, 1
      %s25 = scalar_select %p22, %s23, %s24
      %p28 = pneg %p22
      %p29 = scmp.eq.s32.totalorder %s13, 1
      %p30 = por %p28, %p29
      %p31 = scmp.ne.s32.totalorder %s23, %s26
      %p32 = scmp.eq.s32.totalorder %s13, 0
      %p33 = por %p31, %p32
      %p34 = scmp.ne.s32.totalorder %s23, %s26
      %p35 = scmp.eq.s32.totalorder %s18, 1
      %p36 = por %p34, %p35
      %p37 = scmp.ne.s32.totalorder %s26, %s27
      %p38 = scmp.eq.s32.totalorder %s18, 0
      %p39 = por %p37, %p38
      %p40 = scmp.ne.s32.totalorder %s26, %s27
      %p41 = scmp.eq.s32.totalorder %s19, 1
      %p42 = por %p40, %p41
      %p44 = scmp.ne.s32.totalorder %s27, %s43
      %p45 = scmp.eq.s32.totalorder %s19, 0
      %p46 = por %p44, %p45
      %s47 = ssub.s32 %s13, %s20
      %p48 = scmp.eq.s32.totalorder %s47, 0
      %s50 = sadd.s32 %s49, 1
      %s51 = scalar_select %p48, %s49, %s50
      %p54 = pneg %p48
      %p55 = scmp.eq.s32.totalorder %s13, 1
      %p56 = por %p54, %p55
      %p57 = scmp.ne.s32.totalorder %s49, %s52
      %p58 = scmp.eq.s32.totalorder %s13, 0
      %p59 = por %p57, %p58
      %p60 = scmp.ne.s32.totalorder %s49, %s52
      %p61 = scmp.eq.s32.totalorder %s18, 1
      %p62 = por %p60, %p61
      %p63 = scmp.ne.s32.totalorder %s52, %s53
      %p64 = scmp.eq.s32.totalorder %s18, 0
      %p65 = por %p63, %p64
      %p66 = scmp.ne.s32.totalorder %s52, %s53
      %p67 = scmp.eq.s32.totalorder %s19, 1
      %p68 = por %p66, %p67
      %p70 = scmp.ne.s32.totalorder %s53, %s69
      %p71 = scmp.eq.s32.totalorder %s19, 0
      %p72 = por %p70, %p71
      %p73 = scmp.le.s32.totalorder 1, %s13
      %p74 = scmp.lt.s32.totalorder %s13, 3
      %p75 = pnand %p73, %p74
      %p76 = pneg %p75
      // Predicated region
      $region9: #{tpu_custom_call.1} parent=5 // pred_check
        _
      $region10: #{tpu_custom_call.1} parent=5 // pred_check_branch
        %78 = sbr.rel (%p75) target = $region12
      $region11: #{tpu_custom_call.1} parent=5 // pred_region
        %s79 = ssub.s32 %s13, 1
      $region12: #{tpu_custom_call.1} parent=5 // pred_fallthru
        _
      %p80 = scmp.lt.s32.totalorder %s13, 2
      // Predicated region
      $region13: #{tpu_custom_call.1} parent=5 // pred_check
        %p81 = pneg %p80
      $region14: #{tpu_custom_call.1} parent=5 // pred_check_branch
        %83 = sbr.rel (%p81) target = $region16
      $region15: #{tpu_custom_call.1} parent=5 // pred_region
        // Predicated region
        $region17: #{tpu_custom_call.1} parent=15 // pred_check
          %p84 = pneg %p33
        $region18: #{tpu_custom_call.1} parent=15 // pred_check_branch
          %86 = sbr.rel (%p84) target = $region20
        $region19: #{tpu_custom_call.1} parent=15 // pred_region
          %s87 = sand.u32 %s23, 1
          %s88 = scalar_lea.sflag [#allocation4], %s87
          %s89 = sand.u32 %s23, 1
          %s90 = smul.addr %s89, 4
          %s91 = scalar_lea.vmem [#allocation3], %s90
          %s93 = ssub.s32 64, 64
          %94 = vsyncadd %s88, %s93
          %s95 = smul.addr %s13, 2
          %s96 = smul.addr %s95, 32
          %s97 = scalar_lea.hbm %s0, %s96
          %s98 = sshll.u32 %s91, 4
          %s99 = int_to_ptr.vmem [resolvable:$true] %s98
          %104 = dma.hbm_to_vmem [thread:$0]  %s97, 64, %s99, %s88, 32, 32, 2
        $region20: #{tpu_custom_call.1} parent=15 // pred_fallthru
          _
      $region16: #{tpu_custom_call.1} parent=5 // pred_fallthru
        _
      %p105 = scmp.le.s32.totalorder 1, %s13
      %p106 = scmp.lt.s32.totalorder %s13, 3
      %p107 = pnand %p105, %p106
      %p108 = pneg %p107
      // Predicated region
      $region21: #{tpu_custom_call.1} parent=5 // pred_check
        _
      $region22: #{tpu_custom_call.1} parent=5 // pred_check_branch
        %110 = sbr.rel (%p107) target = $region24
      $region23: #{tpu_custom_call.1} parent=5 // pred_region
        %s111 = ssub.s32 %s13, 1
        %s112 = sand.u32 %s26, 1
        %s113 = scalar_lea.sflag [#allocation4], %s112
        %s114 = sand.u32 %s26, 1
        %s115 = smul.addr %s114, 4
        %s116 = scalar_lea.vmem [#allocation3], %s115
        // Predicated region
        $region25: #{tpu_custom_call.1} parent=23 // pred_check
          %p117 = pneg %p39
        $region26: #{tpu_custom_call.1} parent=23 // pred_check_branch
          %119 = sbr.rel (%p117) target = $region28
        $region27: #{tpu_custom_call.1} parent=23 // pred_region
          %120 = dma.done %s113, 64
        $region28: #{tpu_custom_call.1} parent=23 // pred_fallthru
          _
        %s121 = sand.u32 %s26, 1
        %s122 = scalar_lea.sflag [#allocation4], %s121
        %s123 = sand.u32 %s26, 1
        %s124 = smul.addr %s123, 4
        %s125 = scalar_lea.vmem [#allocation3], %s124
        %p126 = pneg %p39
        %p127 = pneg %p36
        %p128 = pneg %p65
        %p129 = pneg %p62
        %s130 = sand.u32 %s52, 1
        %s131 = scalar_lea.sflag [#allocation5], %s130
        %s132 = sand.u32 %s52, 1
        %s133 = smul.addr %s132, 4
        %s134 = scalar_lea.vmem [#allocation6], %s133
        %vm137 = vcmask 97280
        %138 = vst.msk [vmem:[#allocation2] sm:$0xff] %vm137, 0
        %139 = vst.msk [vmem:[#allocation2 + $0x8] sm:$0xff] %vm137, 0
        %vm140 = vcmask 95232
        %141 = vst.msk [vmem:[#allocation2 + $0x10] sm:$0x3f] %vm140, 0
        %v142 = vld [vmem:[%s116] sm:$0x3]
        %v143 = vld [vmem:[%s116 + $0x2] sm:$0x3]
        %v144 = vunpack.c.0.s8 %v142
        %v145 = vunpack.c.0.s8 %v143
        %146 = vst.msk [vmem:[#allocation2 + $0x3] sm:$0xff] %vm137, %v144
        %147 = vst.msk [vmem:[#allocation2 + $0xb] sm:$0xff] %vm137, %v145
        %v148 = vld [vmem:[#allocation2] sm:$0xff]
        %v149 = vld [vmem:[#allocation2 + $0x8] sm:$0xff]
        %v150 = vld [vmem:[#allocation2 + $0x1] sm:$0xff]
        %v151 = vld [vmem:[#allocation2 + $0x9] sm:$0xff]
        %v152 = vadd.s32 %v148, %v150
        %v153 = vadd.s32 %v149, %v151
        %v154 = vld [vmem:[#allocation2 + $0x2] sm:$0xff]
        %v155 = vld [vmem:[#allocation2 + $0xa] sm:$0xff]
        %v156 = vld [vmem:[#allocation2 + $0x3] sm:$0xff]
        %v157 = vld [vmem:[#allocation2 + $0xb] sm:$0xff]
        %v158 = vadd.s32 %v154, %v156
        %v159 = vadd.s32 %v155, %v157
        %v160 = vld [vmem:[#allocation2 + $0x4] sm:$0xff]
        %v161 = vld [vmem:[#allocation2 + $0xc] sm:$0xff]
        %v162 = vld [vmem:[#allocation2 + $0x5] sm:$0xff]
        %v163 = vld [vmem:[#allocation2 + $0xd] sm:$0xff]
        %v164 = vadd.s32 %v160, %v162
        %v165 = vadd.s32 %v161, %v163
        %v166 = vadd.s32 %v152, %v158
        %v167 = vadd.s32 %v153, %v159
        %v168 = vld [vmem:[#allocation2 + $0x6] sm:$0xff]
        %v169 = vld [vmem:[#allocation2 + $0xe] sm:$0xff]
        %v170 = vadd.s32 %v164, %v168
        %v171 = vadd.s32 %v165, %v169
        %v172 = vadd.s32 %v166, %v170
        %v173 = vadd.s32 %v167, %v171
        %vm174 = vcmp.ge.s32.totalorder %v172, 4
        %vm175 = vcmp.ge.s32.totalorder %v173, 4
        %vm176 = vmpackc.low %vm175, %vm174
        %vm177 = vmpackc.even %vm176, %vm176
        %v178 = vsel %vm177, 16843009, 0
        %v179 = vunpack.c.0.s8 %v178
        %v180 = vunpack.c.1.s8 %v178
        %v181 = vpack.c.b16 %v179, %v179
        %v182 = vpack.c.b8 %v181, %v181
        %v183 = vpack.c.b16 %v180, %v180
        %v184 = vpack.c.b8 %v183, %v183
        %vm185 = vcmask 91136
        %186 = vst.msk [vmem:[%s134] sm:$0x3] %vm185, %v182
        %187 = vst.msk [vmem:[%s134 + $0x2] sm:$0x3] %vm185, %v184
        %s188 = sand.u32 %s52, 1
        %s189 = scalar_lea.sflag [#allocation5], %s188
        %s190 = sand.u32 %s52, 1
        %s191 = smul.addr %s190, 4
        %s192 = scalar_lea.vmem [#allocation6], %s191
        // Predicated region
        $region29: #{tpu_custom_call.1} parent=23 // pred_check
          %p193 = pneg %p62
        $region30: #{tpu_custom_call.1} parent=23 // pred_check_branch
          %195 = sbr.rel (%p193) target = $region32
        $region31: #{tpu_custom_call.1} parent=23 // pred_region
          %s197 = ssub.s32 64, 64
          %198 = vsyncadd %s189, %s197
          %s199 = smul.addr %s18, 2
          %s200 = smul.addr %s199, 32
          %s201 = scalar_lea.hbm %s1, %s200
          %s202 = sshll.u32 %s192, 4
          %s203 = int_to_ptr.vmem [resolvable:$true] %s202
          %208 = dma.vmem_to_hbm [thread:$0]  %s203, 64, %s201, %s189, 32, 32, 2
        $region32: #{tpu_custom_call.1} parent=23 // pred_fallthru
          _
      $region24: #{tpu_custom_call.1} parent=5 // pred_fallthru
        _
      %p209 = scmp.le.s32.totalorder 2, %s13
      // Predicated region
      $region33: #{tpu_custom_call.1} parent=5 // pred_check
        %p210 = pneg %p209
      $region34: #{tpu_custom_call.1} parent=5 // pred_check_branch
        %212 = sbr.rel (%p210) target = $region36
      $region35: #{tpu_custom_call.1} parent=5 // pred_region
        %s213 = ssub.s32 %s13, 2
        // Predicated region
        $region37: #{tpu_custom_call.1} parent=35 // pred_check
          %p214 = pneg %p68
        $region38: #{tpu_custom_call.1} parent=35 // pred_check_branch
          %216 = sbr.rel (%p214) target = $region40
        $region39: #{tpu_custom_call.1} parent=35 // pred_region
          %s217 = sand.u32 %s53, 1
          %s218 = scalar_lea.sflag [#allocation5], %s217
          %s219 = sand.u32 %s53, 1
          %s220 = smul.addr %s219, 4
          %s221 = scalar_lea.vmem [#allocation6], %s220
          %222 = dma.done %s218, 64
        $region40: #{tpu_custom_call.1} parent=35 // pred_fallthru
          _
      $region36: #{tpu_custom_call.1} parent=5 // pred_fallthru
        _
    $region6: #{tpu_custom_call.1} parent=1 // loop_footer
      %s17 = sadd.s32 1, %s13
    $region7: #{tpu_custom_call.1} parent=1 // loop_footer_branch
      %12 = sbr.rel target = $region3
    $region8: #{tpu_custom_call.1} parent=1 // loop_exit
      _
    %223 = vsyncpa [#allocation4], 1
    %s224 = scalar_lea.sflag [#allocation4], 1
    %225 = vsyncpa %s224, 1
    %226 = vsyncpa [#allocation5], 1
    %s227 = scalar_lea.sflag [#allocation5], 1
    %228 = vsyncpa %s227, 1

</llo_original>
